<compile_context>
chip_gen: v6e
topology: v6e:2x2x1
jax: 0.10.0
libtpu: 0.0.40
codegen_flags: <defaults>
</compile_context>

<pallas_src>
import jax
import jax.numpy as jnp
from jax.experimental import pallas as pl
from jax.experimental.pallas import tpu as pltpu


def _gcn_brief_kernel(x_ref, abd_ref, w_ref, b_ref, o_ref):
    # x_ref:   (1, C_in, BLK)   flattened (tile_T, V) time-vertex slab (lane-dense)
    # abd_ref: (1, BLK, BLK)    block-diagonal A (tile_T copies of the (V, V) adjacency)
    # w_ref:   (C_out, C_in)    1x1-conv weight
    # b_ref:   (C_out, 1)       conv bias
    # o_ref:   (1, C_out, BLK)
    x = x_ref[0]                                   # (C_in, BLK)
    abd = abd_ref[0]                               # (BLK, BLK)
    w = w_ref[...]                                 # (C_out, C_in)
    b = b_ref[...]                                 # (C_out, 1)

    # Graph contraction first (fewer MXU rows when C_in <= C_out), then the 1x1-conv
    # channel mixing.  Both matmuls are lane-dense and there are no in-kernel reshapes.
    z = jnp.dot(x, abd, preferred_element_type=jnp.float32)     # (C_in, BLK)
    out = jnp.dot(w, z, preferred_element_type=jnp.float32)     # (C_out, BLK)

    # Conv bias pushed through the A contraction:
    #   sum_v (W x + b) * A  ==  W (x A) + b * colsum(A).
    colsum = jnp.sum(abd, axis=0, keepdims=True)                # (1, BLK)
    out = out + b * colsum

    o_ref[0] = out.astype(o_ref.dtype)


def _pick_tile_t(t, v, max_blk=256):
    """Largest tile_T dividing T with (tile_T * V) % 128 == 0 and tile_T * V <= max_blk."""
    best = None
    for cand in range(1, t + 1):
        if t % cand == 0 and (cand * v) % 128 == 0 and cand * v <= max_blk:
            best = cand
    if best is None:
        best = t  # block == full flattened extent (always a legal BlockSpec)
    return best


def graph_conv_net_brief_2d(x, A, weight, bias):
    """x: (N, C_in, T, V), A: (N, V, V), weight: (C_out, C_in), bias: (C_out,)
    Returns (out, A) with out: (N, C_out, T, V)."""
    n, c_in, t, v = x.shape
    c_out = weight.shape[0]

    tile_t = _pick_tile_t(t, v)
    blk = tile_t * v
    n_tt = t // tile_t

    # Wrapper-side layout plumbing (kept out of the kernel body).
    x_flat = x.reshape(n, c_in, t * v)
    eye = jnp.eye(tile_t, dtype=A.dtype)
    # A_bd[n, i*V+v, j*V+w] = (i == j) * A[n, v, w]   (block-diagonal, tile_T blocks)
    a_bd = jnp.einsum("ij,nvw->nivjw", eye, A).reshape(n, blk, blk)
    bias2d = bias.reshape(c_out, 1)

    out_flat = pl.pallas_call(
        _gcn_brief_kernel,
        out_shape=jax.ShapeDtypeStruct((n, c_out, t * v), x.dtype),
        grid_spec=pltpu.PrefetchScalarGridSpec(
            num_scalar_prefetch=0,
            grid=(n, n_tt),
            in_specs=[
                pl.BlockSpec((1, c_in, blk), lambda i, j: (i, 0, j)),
                # Same block across the T-tile axis -> stays resident, no re-DMA.
                pl.BlockSpec((1, blk, blk), lambda i, j: (i, 0, 0)),
                pl.BlockSpec((c_out, c_in), lambda i, j: (0, 0)),
                pl.BlockSpec((c_out, 1), lambda i, j: (0, 0)),
            ],
            out_specs=pl.BlockSpec((1, c_out, blk), lambda i, j: (i, 0, j)),
        ),
        compiler_params=pltpu.CompilerParams(
            dimension_semantics=("parallel", "parallel"),
            # Tiny tiles here; re-derive tile_T / this limit for production ST-GCN
            # sizes (v7x only has 64 MiB physical VMEM).
            vmem_limit_bytes=32 * 1024 * 1024,
        ),
    )(x_flat, a_bd, weight, bias2d)

    out = out_flat.reshape(n, c_out, t, v)
    return out, A


if __name__ == "__main__":
    N, C_IN, C_OUT, T, V = 2, 4, 8, 8, 16

    key = jax.random.PRNGKey(0)
    kx, ka, kw, kb = jax.random.split(key, 4)
    x = jax.random.normal(kx, (N, C_IN, T, V), dtype=jnp.float32)
    A = jax.random.normal(ka, (N, V, V), dtype=jnp.float32)
    # Deterministic synthetic parameters (Conv2d weight (C_out, C_in, 1, 1) squeezed).
    weight = jax.random.normal(kw, (C_OUT, C_IN), dtype=jnp.float32) * 0.1
    bias = jax.random.normal(kb, (C_OUT,), dtype=jnp.float32) * 0.1

    out, A_out = graph_conv_net_brief_2d(x, A, weight, bias)
    out = jax.block_until_ready(out)

    # Pure-JAX reference for correctness.
    y_ref = jnp.einsum("oi,nitv->notv", weight, x) + bias[None, :, None, None]
    out_ref = jnp.einsum("nctv,nvw->nctw", y_ref, A)

    assert out.shape == (N, C_OUT, T, V)
    assert jnp.allclose(out, out_ref, atol=1e-4, rtol=1e-4), "mismatch vs reference"
    assert jnp.array_equal(A_out, A)

    print("KERNEL_OK")
</pallas_src>

<mosaic_0001>
module attributes {stable_mosaic.version = 11 : i64} {
  func.func @_gcn_brief_kernel(%arg0: i32, %arg1: i32, %arg2: memref<1x4x128xf32, #tpu.memory_space<vmem>>, %arg3: memref<1x128x128xf32, #tpu.memory_space<vmem>>, %arg4: memref<8x4xf32, #tpu.memory_space<vmem>>, %arg5: memref<8x1xf32, #tpu.memory_space<vmem>>, %arg6: memref<1x8x128xf32, #tpu.memory_space<vmem>>) attributes {dimension_semantics = [#tpu.dimension_semantics<parallel>, #tpu.dimension_semantics<parallel>], iteration_bounds = array<i64: 2, 1>, scalar_prefetch = 0 : i64, scratch_operands = 0 : i64, tpu.core_type = #tpu.core_type<tc>, window_params = [{transform_indices = @transform_0, window_bounds = array<i64: 1, 4, 128>}, {transform_indices = @transform_1, window_bounds = array<i64: 1, 128, 128>}, {pipeline_mode = #tpu.pipeline_mode<synchronous>, transform_indices = @transform_2, window_bounds = array<i64: 8, 4>}, {pipeline_mode = #tpu.pipeline_mode<synchronous>, transform_indices = @transform_3, window_bounds = array<i64: 8, 1>}, {transform_indices = @transform_4, window_bounds = array<i64: 1, 8, 128>}]} {
    %c0 = arith.constant 0 : index
    %c0_0 = arith.constant 0 : index
    %c0_1 = arith.constant 0 : index
    %0 = vector.load %arg2[%c0, %c0_0, %c0_1] : memref<1x4x128xf32, #tpu.memory_space<vmem>>, vector<1x4x128xf32>
    %1 = vector.shape_cast %0 : vector<1x4x128xf32> to vector<4x128xf32>
    %c0_2 = arith.constant 0 : index
    %c0_3 = arith.constant 0 : index
    %c0_4 = arith.constant 0 : index
    %2 = vector.load %arg3[%c0_2, %c0_3, %c0_4] : memref<1x128x128xf32, #tpu.memory_space<vmem>>, vector<1x128x128xf32>
    %3 = vector.shape_cast %2 : vector<1x128x128xf32> to vector<128x128xf32>
    %c0_5 = arith.constant 0 : index
    %c0_6 = arith.constant 0 : index
    %4 = vector.load %arg4[%c0_5, %c0_6] : memref<8x4xf32, #tpu.memory_space<vmem>>, vector<8x4xf32>
    %c0_7 = arith.constant 0 : index
    %c0_8 = arith.constant 0 : index
    %5 = vector.load %arg5[%c0_7, %c0_8] : memref<8x1xf32, #tpu.memory_space<vmem>>, vector<8x1xf32>
    %cst = arith.constant dense<0.000000e+00> : vector<4x128xf32>
    %6 = tpu.matmul %1, %3, %cst {dimension_numbers = #tpu.dot_dimension_numbers<[1], [0], [0], [1], [0, 0, 1, 1], [], []>} : vector<4x128xf32>, vector<128x128xf32>, vector<4x128xf32> -> vector<4x128xf32>
    %cst_9 = arith.constant dense<0.000000e+00> : vector<8x128xf32>
    %7 = tpu.matmul %4, %6, %cst_9 {dimension_numbers = #tpu.dot_dimension_numbers<[1], [0], [0], [1], [0, 0, 1, 1], [], []>} : vector<8x4xf32>, vector<4x128xf32>, vector<8x128xf32> -> vector<8x128xf32>
    %cst_10 = arith.constant dense<0.000000e+00> : vector<128xf32>
    %8 = vector.multi_reduction <add>, %3, %cst_10 [0] : vector<128x128xf32> to vector<128xf32>
    %9 = vector.shape_cast %8 : vector<128xf32> to vector<1x128xf32>
    %10 = vector.broadcast %5 : vector<8x1xf32> to vector<8x128xf32>
    %11 = vector.broadcast %9 : vector<1x128xf32> to vector<8x128xf32>
    %12 = arith.mulf %10, %11 : vector<8x128xf32>
    %13 = arith.addf %7, %12 : vector<8x128xf32>
    %c0_11 = arith.constant 0 : index
    %c0_12 = arith.constant 0 : index
    %c0_13 = arith.constant 0 : index
    %14 = vector.load %arg6[%c0_11, %c0_12, %c0_13] : memref<1x8x128xf32, #tpu.memory_space<vmem>>, vector<1x8x128xf32>
    %15 = vector.shape_cast %14 : vector<1x8x128xf32> to vector<8x128xf32>
    %16 = vector.shape_cast %13 : vector<8x128xf32> to vector<1x8x128xf32>
    tpu.vector_store %arg6[%c0_11, %c0_12, %c0_13], %16 {strides = array<i32>} : memref<1x8x128xf32, #tpu.memory_space<vmem>>, vector<1x8x128xf32>,
    return
  }
  func.func @transform_0(%arg0: i32, %arg1: i32) -> (i32, i32, i32) {
    %c0_i32 = arith.constant 0 : i32
    %c0_i32_0 = arith.constant 0 : i32
    return %arg0, %c0_i32, %arg1 : i32, i32, i32
  }
  func.func @transform_1(%arg0: i32, %arg1: i32) -> (i32, i32, i32) {
    %c0_i32 = arith.constant 0 : i32
    %c0_i32_0 = arith.constant 0 : i32
    %c0_i32_1 = arith.constant 0 : i32
    return %arg0, %c0_i32, %c0_i32_0 : i32, i32, i32
  }
  func.func @transform_2(%arg0: i32, %arg1: i32) -> (i32, i32) {
    %c0_i32 = arith.constant 0 : i32
    %c0_i32_0 = arith.constant 0 : i32
    %c0_i32_1 = arith.constant 0 : i32
    return %c0_i32, %c0_i32_0 : i32, i32
  }
  func.func @transform_3(%arg0: i32, %arg1: i32) -> (i32, i32) {
    %c0_i32 = arith.constant 0 : i32
    %c0_i32_0 = arith.constant 0 : i32
    %c0_i32_1 = arith.constant 0 : i32
    return %c0_i32, %c0_i32_0 : i32, i32
  }
  func.func @transform_4(%arg0: i32, %arg1: i32) -> (i32, i32, i32) {
    %c0_i32 = arith.constant 0 : i32
    %c0_i32_0 = arith.constant 0 : i32
    return %arg0, %c0_i32, %arg1 : i32, i32, i32
  }
}

</mosaic_0001>

<llo_original>
// kernel: tpu_custom_call.1
$region0: #{tpu_custom_call.1}
  #allocation0 [shape = 'u32[]', space=smem, size = 0x4, offset = 0x4, fixed_abs, tag = 'smem constant byte address 0x4 - core index']
  #allocation1 [shape = 'u32[144,128]{1,0:T(1,128)}', space=vmem, size = 0x12000, scoped, tag = 'internal scratch']
  %s0 = inlined_call_operand.vmem [shape: f32[2,4,128], index: 0, kind: input, shape index: {}]
  %s1 = inlined_call_operand.hbm [shape: f32[2,128,128], index: 1, kind: input, shape index: {}]
  %s2 = inlined_call_operand.vmem [shape: f32[8,4], index: 2, kind: input, shape index: {}]
  %s3 = inlined_call_operand.vmem [shape: f32[8,1], index: 3, kind: input, shape index: {}]
  %s4 = inlined_call_operand.hbm [shape: f32[2,8,128], index: 4, kind: output, shape index: {}]
  %s5 = sld [smem:[#allocation0]]
  $region53: #{tpu_custom_call.1} parent=0
    _
  %s7 = ssub.s32 1, %s5
  %s8 = scalar_select 0, %s7, %s5
  $region1: #{tpu_custom_call.1} parent=0
    #allocation2 [shape = 'u8[131072]{0}', space=vmem, size = 0x20000, scoped, tag = 'input window, operand 1']
    #allocation3 [shape = 's32[2]{0}', space=sflag, size = 0x8, scoped, tag = 'scoped memory for tpu_custom_call.1']
    #allocation4 [shape = 's32[2]{0}', space=sflag, size = 0x8, scoped, tag = 'scoped memory for tpu_custom_call.1']
    #allocation5 [shape = 'u8[8192]{0}', space=vmem, size = 0x2000, scoped, tag = 'output window, operand 0']
    %9 = vsyncpa [#allocation3], 0
    %s10 = scalar_lea.sflag [#allocation3], 1
    %11 = vsyncpa %s10, 0
    %12 = vsyncpa [#allocation4], 0
    %s13 = scalar_lea.sflag [#allocation4], 1
    %14 = vsyncpa %s13, 0
    loop: start=0, step=1, limit=4
    $region2: #{tpu_custom_call.1} parent=1 // loop_pre_header
      _
    $region3: #{tpu_custom_call.1} parent=1 // loop_header
      %s16 = sphi 0, %s20
      %p17 = scmp.ge.s32.totalorder %s16, 4
      %s23 = sphi 0, %s35
      %s24 = sphi 0, %s31
      %s25 = sphi 0, %s23
      %s26 = sphi 0, %s24
      %s27 = sphi 0, %s25
      %s28 = sphi 0, %s26
      %s40 = sphi 0, %s42
      %s43 = sphi 0, %s40
      %s44 = sphi 0, %s43
      %s60 = sphi 0, %s44
      %s66 = sphi 0, %s68
      %s69 = sphi 0, %s66
      %s70 = sphi 0, %s69
      %s86 = sphi 0, %s70
      %s90 = sphi 0, %s90
      %s92 = sphi 0, %s90
      %s93 = sphi 0, %s92
      %s107 = sphi 0, %s93
      %s111 = sphi 0, %s111
      %s113 = sphi 0, %s111
      %s114 = sphi 0, %s113
      %s128 = sphi 0, %s114
      %s136 = sphi 0, %s138
      %s139 = sphi 0, %s136
      %s140 = sphi 0, %s139
      %s156 = sphi 0, %s140
    $region4: #{tpu_custom_call.1} parent=1 // loop_header_branch
      %19 = sbr.rel (%p17) target = $region8
    $region5: #{tpu_custom_call.1} parent=1 // loop_body
      %s21 = ssub.s32 %s16, 1
      %s22 = ssub.s32 %s16, 2
      %s29 = sadd.s32 1, %s24
      %p30 = scmp.ge.s32.totalorder %s29, 1
      %s31 = scalar_select %p30, 0, %s29
      %s32 = sadd.s32 1, %s23
      %s33 = scalar_select %p30, %s32, %s23
      %p34 = scmp.ge.s32.totalorder %s33, 2
      %s35 = scalar_select %p34, 0, %s33
      %s36 = ssub.s32 %s23, %s35
      %s37 = ssub.s32 %s24, %s31
      %s38 = sor.u32 %s36, %s37
      %p39 = scmp.eq.s32.totalorder %s38, 0
      %s41 = sadd.s32 %s40, 1
      %s42 = scalar_select %p39, %s40, %s41
      %p45 = pneg %p39
      %p46 = scmp.eq.s32.totalorder %s16, 1
      %p47 = por %p45, %p46
      %p48 = scmp.ne.s32.totalorder %s40, %s43
      %p49 = scmp.eq.s32.totalorder %s16, 0
      %p50 = por %p48, %p49
      %p51 = scmp.ne.s32.totalorder %s40, %s43
      %p52 = scmp.eq.s32.totalorder %s21, 1
      %p53 = por %p51, %p52
      %p54 = scmp.ne.s32.totalorder %s43, %s44
      %p55 = scmp.eq.s32.totalorder %s21, 0
      %p56 = por %p54, %p55
      %p57 = scmp.ne.s32.totalorder %s43, %s44
      %p58 = scmp.eq.s32.totalorder %s22, 1
      %p59 = por %p57, %p58
      %p61 = scmp.ne.s32.totalorder %s44, %s60
      %p62 = scmp.eq.s32.totalorder %s22, 0
      %p63 = por %p61, %p62
      %s64 = ssub.s32 %s23, %s35
      %p65 = scmp.eq.s32.totalorder %s64, 0
      %s67 = sadd.s32 %s66, 1
      %s68 = scalar_select %p65, %s66, %s67
      %p71 = pneg %p65
      %p72 = scmp.eq.s32.totalorder %s16, 1
      %p73 = por %p71, %p72
      %p74 = scmp.ne.s32.totalorder %s66, %s69
      %p75 = scmp.eq.s32.totalorder %s16, 0
      %p76 = por %p74, %p75
      %p77 = scmp.ne.s32.totalorder %s66, %s69
      %p78 = scmp.eq.s32.totalorder %s21, 1
      %p79 = por %p77, %p78
      %p80 = scmp.ne.s32.totalorder %s69, %s70
      %p81 = scmp.eq.s32.totalorder %s21, 0
      %p82 = por %p80, %p81
      %p83 = scmp.ne.s32.totalorder %s69, %s70
      %p84 = scmp.eq.s32.totalorder %s22, 1
      %p85 = por %p83, %p84
      %p87 = scmp.ne.s32.totalorder %s70, %s86
      %p88 = scmp.eq.s32.totalorder %s22, 0
      %p89 = por %p87, %p88
      %s91 = sadd.s32 %s90, 1
      %p94 = scmp.eq.s32.totalorder %s16, 1
      %p95 = scmp.ne.s32.totalorder %s90, %s92
      %p96 = scmp.eq.s32.totalorder %s16, 0
      %p97 = por %p95, %p96
      %p98 = scmp.ne.s32.totalorder %s90, %s92
      %p99 = scmp.eq.s32.totalorder %s21, 1
      %p100 = por %p98, %p99
      %p101 = scmp.ne.s32.totalorder %s92, %s93
      %p102 = scmp.eq.s32.totalorder %s21, 0
      %p103 = por %p101, %p102
      %p104 = scmp.ne.s32.totalorder %s92, %s93
      %p105 = scmp.eq.s32.totalorder %s22, 1
      %p106 = por %p104, %p105
      %p108 = scmp.ne.s32.totalorder %s93, %s107
      %p109 = scmp.eq.s32.totalorder %s22, 0
      %p110 = por %p108, %p109
      %s112 = sadd.s32 %s111, 1
      %p115 = scmp.eq.s32.totalorder %s16, 1
      %p116 = scmp.ne.s32.totalorder %s111, %s113
      %p117 = scmp.eq.s32.totalorder %s16, 0
      %p118 = por %p116, %p117
      %p119 = scmp.ne.s32.totalorder %s111, %s113
      %p120 = scmp.eq.s32.totalorder %s21, 1
      %p121 = por %p119, %p120
      %p122 = scmp.ne.s32.totalorder %s113, %s114
      %p123 = scmp.eq.s32.totalorder %s21, 0
      %p124 = por %p122, %p123
      %p125 = scmp.ne.s32.totalorder %s113, %s114
      %p126 = scmp.eq.s32.totalorder %s22, 1
      %p127 = por %p125, %p126
      %p129 = scmp.ne.s32.totalorder %s114, %s128
      %p130 = scmp.eq.s32.totalorder %s22, 0
      %p131 = por %p129, %p130
      %s132 = ssub.s32 %s23, %s35
      %s133 = ssub.s32 %s24, %s31
      %s134 = sor.u32 %s132, %s133
      %p135 = scmp.eq.s32.totalorder %s134, 0
      %s137 = sadd.s32 %s136, 1
      %s138 = scalar_select %p135, %s136, %s137
      %p141 = pneg %p135
      %p142 = scmp.eq.s32.totalorder %s16, 1
      %p143 = por %p141, %p142
      %p144 = scmp.ne.s32.totalorder %s136, %s139
      %p145 = scmp.eq.s32.totalorder %s16, 0
      %p146 = por %p144, %p145
      %p147 = scmp.ne.s32.totalorder %s136, %s139
      %p148 = scmp.eq.s32.totalorder %s21, 1
      %p149 = por %p147, %p148
      %p150 = scmp.ne.s32.totalorder %s139, %s140
      %p151 = scmp.eq.s32.totalorder %s21, 0
      %p152 = por %p150, %p151
      %p153 = scmp.ne.s32.totalorder %s139, %s140
      %p154 = scmp.eq.s32.totalorder %s22, 1
      %p155 = por %p153, %p154
      %p157 = scmp.ne.s32.totalorder %s140, %s156
      %p158 = scmp.eq.s32.totalorder %s22, 0
      %p159 = por %p157, %p158
      %p160 = scmp.le.s32.totalorder 1, %s16
      %p161 = scmp.lt.s32.totalorder %s16, 3
      %p162 = pnand %p160, %p161
      %p163 = pneg %p162
      // Predicated region
      $region9: #{tpu_custom_call.1} parent=5 // pred_check
        _
      $region10: #{tpu_custom_call.1} parent=5 // pred_check_branch
        %165 = sbr.rel (%p162) target = $region12
      $region11: #{tpu_custom_call.1} parent=5 // pred_region
        %s166 = ssub.s32 %s16, 1
        // Predicated region
        $region13: #{tpu_custom_call.1} parent=11 // pred_check
          %p167 = pneg %p103
        $region14: #{tpu_custom_call.1} parent=11 // pred_check_branch
          %169 = sbr.rel (%p167) target = $region16
        $region15: #{tpu_custom_call.1} parent=11 // pred_region
          _
        $region16: #{tpu_custom_call.1} parent=11 // pred_fallthru
          _
        // Predicated region
        $region17: #{tpu_custom_call.1} parent=11 // pred_check
          %p170 = pneg %p124
        $region18: #{tpu_custom_call.1} parent=11 // pred_check_branch
          %172 = sbr.rel (%p170) target = $region20
        $region19: #{tpu_custom_call.1} parent=11 // pred_region
          _
        $region20: #{tpu_custom_call.1} parent=11 // pred_fallthru
          _
      $region12: #{tpu_custom_call.1} parent=5 // pred_fallthru
        _
      %p173 = scmp.lt.s32.totalorder %s16, 2
      // Predicated region
      $region21: #{tpu_custom_call.1} parent=5 // pred_check
        %p174 = pneg %p173
      $region22: #{tpu_custom_call.1} parent=5 // pred_check_branch
        %176 = sbr.rel (%p174) target = $region24
      $region23: #{tpu_custom_call.1} parent=5 // pred_region
        // Predicated region
        $region25: #{tpu_custom_call.1} parent=23 // pred_check
          %p177 = pneg %p50
        $region26: #{tpu_custom_call.1} parent=23 // pred_check_branch
          %179 = sbr.rel (%p177) target = $region28
        $region27: #{tpu_custom_call.1} parent=23 // pred_region
          %p180 = scmp.lt.s32.totalorder %s23, 1
          %s181 = scalar_select %p180, %s23, 1
          %p182 = scmp.lt.s32.totalorder %s24, 0
          %s183 = scalar_select %p182, %s24, 0
          %s184 = sadd.s32 %s183, %s181
          %s185 = smul.addr %s184, 4
          %s186 = scalar_lea.vmem %s0, %s185
        $region28: #{tpu_custom_call.1} parent=23 // pred_fallthru
          _
        // Predicated region
        $region29: #{tpu_custom_call.1} parent=23 // pred_check
          %p187 = pneg %p76
        $region30: #{tpu_custom_call.1} parent=23 // pred_check_branch
          %189 = sbr.rel (%p187) target = $region32
        $region31: #{tpu_custom_call.1} parent=23 // pred_region
          %s190 = sand.u32 %s66, 1
          %s191 = scalar_lea.sflag [#allocation3], %s190
          %s192 = sand.u32 %s66, 1
          %s193 = smul.addr %s192, 128
          %s194 = scalar_lea.vmem [#allocation2], %s193
          %s196 = ssub.s32 2048, 2048
          %197 = vsyncadd %s191, %s196
          %s198 = smul.addr %s23, 16
          %s199 = smul.addr %s198, 128
          %s200 = scalar_lea.hbm %s1, %s199
          %s201 = sshll.u32 %s194, 4
          %s202 = int_to_ptr.vmem [resolvable:$true] %s201
          %207 = dma.hbm_to_vmem [thread:$0]  %s200, 2048, %s202, %s191, 128, 128, 8
        $region32: #{tpu_custom_call.1} parent=23 // pred_fallthru
          _
      $region24: #{tpu_custom_call.1} parent=5 // pred_fallthru
        _
      %p208 = scmp.le.s32.totalorder 1, %s16
      %p209 = scmp.lt.s32.totalorder %s16, 3
      %p210 = pnand %p208, %p209
      %p211 = pneg %p210
      // Predicated region
      $region33: #{tpu_custom_call.1} parent=5 // pred_check
        _
      $region34: #{tpu_custom_call.1} parent=5 // pred_check_branch
        %213 = sbr.rel (%p210) target = $region36
      $region35: #{tpu_custom_call.1} parent=5 // pred_region
        %s214 = ssub.s32 %s16, 1
        %s215 = sand.u32 %s69, 1
        %s216 = scalar_lea.sflag [#allocation3], %s215
        %s217 = sand.u32 %s69, 1
        %s218 = smul.addr %s217, 128
        %s219 = scalar_lea.vmem [#allocation2], %s218
        // Predicated region
        $region37: #{tpu_custom_call.1} parent=35 // pred_check
          %p220 = pneg %p82
        $region38: #{tpu_custom_call.1} parent=35 // pred_check_branch
          %222 = sbr.rel (%p220) target = $region40
        $region39: #{tpu_custom_call.1} parent=35 // pred_region
          %223 = dma.done %s216, 2048
        $region40: #{tpu_custom_call.1} parent=35 // pred_fallthru
          _
        %p224 = scmp.lt.s32.totalorder %s25, 1
        %s225 = scalar_select %p224, %s25, 1
        %p226 = scmp.lt.s32.totalorder %s26, 0
        %s227 = scalar_select %p226, %s26, 0
        %s228 = sadd.s32 %s227, %s225
        %s229 = smul.addr %s228, 4
        %s230 = scalar_lea.vmem %s0, %s229
        %p231 = pneg %p56
        %p232 = pneg %p53
        %s233 = sand.u32 %s69, 1
        %s234 = scalar_lea.sflag [#allocation3], %s233
        %s235 = sand.u32 %s69, 1
        %s236 = smul.addr %s235, 128
        %s237 = scalar_lea.vmem [#allocation2], %s236
        %p238 = pneg %p82
        %p239 = pneg %p79
        %p240 = pneg %p103
        %p241 = pneg %p100
        %p242 = pneg %p124
        %p243 = pneg %p121
        %p244 = pneg %p152
        %p245 = pneg %p149
        %s246 = sand.u32 %s139, 1
        %s247 = scalar_lea.sflag [#allocation4], %s246
        %s248 = sand.u32 %s139, 1
        %s249 = smul.addr %s248, 8
        %s250 = scalar_lea.vmem [#allocation5], %s249
        %p251 = scmp.lt.s32.totalorder %s25, 1
        %s252 = scalar_select %p251, %s25, 1
        %p253 = scmp.lt.s32.totalorder %s26, 0
        %s254 = scalar_select %p253, %s26, 0
        %s255 = sadd.s32 %s254, %s252
        %s256 = smul.addr %s255, 4
        %s257 = scalar_lea.vmem %s0, %s256
        %v258 = vld [vmem:[%s257] sm:$0xf]
        %v259 = vld [vmem:[%s219] sm:$0xff]
        %v260 = vld [vmem:[%s219 + $0x8] sm:$0xff]
        %v261 = vld [vmem:[%s219 + $0x10] sm:$0xff]
        %v262 = vld [vmem:[%s219 + $0x18] sm:$0xff]
        %v263 = vld [vmem:[%s219 + $0x20] sm:$0xff]
        %v264 = vld [vmem:[%s219 + $0x28] sm:$0xff]
        %v265 = vld [vmem:[%s219 + $0x30] sm:$0xff]
        %v266 = vld [vmem:[%s219 + $0x38] sm:$0xff]
        %v267 = vld [vmem:[%s219 + $0x40] sm:$0xff]
        %v268 = vld [vmem:[%s219 + $0x48] sm:$0xff]
        %v269 = vld [vmem:[%s219 + $0x50] sm:$0xff]
        %v270 = vld [vmem:[%s219 + $0x58] sm:$0xff]
        %v271 = vld [vmem:[%s219 + $0x60] sm:$0xff]
        %v272 = vld [vmem:[%s219 + $0x68] sm:$0xff]
        %v273 = vld [vmem:[%s219 + $0x70] sm:$0xff]
        %v274 = vld [vmem:[%s219 + $0x78] sm:$0xff]
        %v275 = vld [vmem:[%s2] sm:$0xff]
        %v276 = vld [vmem:[%s3] sm:$0xff]
        %277 = vmatprep.subr.mxu0 0.0
        %278 = vmatpush1.msra.mxu0 %v274
        %279 = vmatprep.subr.mxu0 0.0
        %280 = vmatpush1.msra.mxu0 %v273
        %281 = vmatprep.subr.mxu0 0.0
        %282 = vmatpush1.msra.mxu0 %v272
        %283 = vmatprep.subr.mxu0 0.0
        %284 = vmatpush1.msra.mxu0 %v271
        %285 = vmatprep.subr.mxu0 0.0
        %286 = vmatpush1.msra.mxu0 %v270
        %287 = vmatprep.subr.mxu0 0.0
        %288 = vmatpush1.msra.mxu0 %v269
        %289 = vmatprep.subr.mxu0 0.0
        %290 = vmatpush1.msra.mxu0 %v268
        %291 = vmatprep.subr.mxu0 0.0
        %292 = vmatpush1.msra.mxu0 %v267
        %293 = vmatprep.subr.mxu0 0.0
        %294 = vmatpush1.msra.mxu0 %v266
        %295 = vmatprep.subr.mxu0 0.0
        %296 = vmatpush1.msra.mxu0 %v265
        %297 = vmatprep.subr.mxu0 0.0
        %298 = vmatpush1.msra.mxu0 %v264
        %299 = vmatprep.subr.mxu0 0.0
        %300 = vmatpush1.msra.mxu0 %v263
        %301 = vmatprep.subr.mxu0 0.0
        %302 = vmatpush1.msra.mxu0 %v262
        %303 = vmatprep.subr.mxu0 0.0
        %304 = vmatpush1.msra.mxu0 %v261
        %305 = vmatprep.subr.mxu0 0.0
        %306 = vmatpush1.msra.mxu0 %v260
        %307 = vmatprep.subr.mxu0 0.0
        %308 = vmatpush1.msra.mxu0 %v259
        %309 = vmatprep.subr.mxu0 0.0
        %310 = vmatpush2.msra.mxu0 0.0
        %311 = vmatprep.subr.mxu0 0.0
        %312 = vmatpush2.msra.mxu0 0.0
        %313 = vmatprep.subr.mxu0 0.0
        %314 = vmatpush2.msra.mxu0 0.0
        %315 = vmatprep.subr.mxu0 0.0
        %316 = vmatpush2.msra.mxu0 0.0
        %317 = vmatprep.subr.mxu0 0.0
        %318 = vmatpush2.msra.mxu0 0.0
        %319 = vmatprep.subr.mxu0 0.0
        %320 = vmatpush2.msra.mxu0 0.0
        %321 = vmatprep.subr.mxu0 0.0
        %322 = vmatpush2.msra.mxu0 0.0
        %323 = vmatprep.subr.mxu0 0.0
        %324 = vmatpush2.msra.mxu0 0.0
        %325 = vmatprep.subr.mxu0 0.0
        %326 = vmatpush2.msra.mxu0 0.0
        %327 = vmatprep.subr.mxu0 0.0
        %328 = vmatpush2.msra.mxu0 0.0
        %329 = vmatprep.subr.mxu0 0.0
        %330 = vmatpush2.msra.mxu0 0.0
        %331 = vmatprep.subr.mxu0 0.0
        %332 = vmatpush2.msra.mxu0 0.0
        %333 = vmatprep.subr.mxu0 0.0
        %334 = vmatpush2.msra.mxu0 0.0
        %335 = vmatprep.subr.mxu0 0.0
        %336 = vmatpush2.msra.mxu0 0.0
        %337 = vmatprep.subr.mxu0 0.0
        %338 = vmatpush2.msra.mxu0 0.0
        %339 = vmatprep.subr.mxu0 0.0
        %340 = vmatpush2.msra.mxu0 0.0
        %341 = vmatprep.mubr.f32.mxu0 0.0
        %342 = vmatmul.mubr.f32.gmra.mxu0 %v258
        %v343 = vpop.f32.mrf.mxu0
        %v344 = vadd.f32 0.0, %v343
        %v345 = vpop.f32.mrf.mxu0
        %346 = vdwg.mxu0
        %v347 = vadd.f32 %v259, %v260
        %v348 = vadd.f32 %v347, %v261
        %v349 = vadd.f32 %v348, %v262
        %v350 = vadd.f32 %v349, %v263
        %v351 = vadd.f32 %v350, %v264
        %v352 = vadd.f32 %v351, %v265
        %v353 = vadd.f32 %v352, %v266
        %v354 = vadd.f32 %v353, %v267
        %v355 = vadd.f32 %v354, %v268
        %v356 = vadd.f32 %v355, %v269
        %v357 = vadd.f32 %v356, %v270
        %v358 = vadd.f32 %v357, %v271
        %v359 = vadd.f32 %v358, %v272
        %v360 = vadd.f32 %v359, %v273
        %v361 = vadd.f32 %v360, %v274
        %v362 = vrot.slane %v361, 4
        %v363 = vadd.f32 %v361, %v362
        %v364 = vrot.slane %v363, 2
        %v365 = vadd.f32 %v363, %v364
        %v366 = vrot.slane %v365, 1
        %v367 = vadd.f32 %v365, %v366
        %369 = vset.pattern.permute.xlu0 0
        %370 = vperm.xlu0 %369, %v276
        %v371 = vpop.permute.xlu0 %370
        %v373 = vmul.f32 %v371, %v367
        %vm374 = vcmask 31744
        %v376 = vsel %vm374, %v275, 0
        %vm378 = vcmask 1043456
        %v380 = vsel %vm378, %v344, 0
        %382 = vmatprep.subr.mxu0 0.0
        %383 = vmatpush1.msra.mxu0 0.0
        %384 = vmatprep.subr.mxu0 0.0
        %385 = vmatpush1.msra.mxu0 0.0
        %386 = vmatprep.subr.mxu0 0.0
        %387 = vmatpush1.msra.mxu0 0.0
        %388 = vmatprep.subr.mxu0 0.0
        %389 = vmatpush1.msra.mxu0 0.0
        %390 = vmatprep.subr.mxu0 0.0
        %391 = vmatpush1.msra.mxu0 0.0
        %392 = vmatprep.subr.mxu0 0.0
        %393 = vmatpush1.msra.mxu0 0.0
        %394 = vmatprep.subr.mxu0 0.0
        %395 = vmatpush1.msra.mxu0 0.0
        %396 = vmatprep.subr.mxu0 0.0
        %397 = vmatpush1.msra.mxu0 0.0
        %398 = vmatprep.subr.mxu0 0.0
        %399 = vmatpush1.msra.mxu0 0.0
        %400 = vmatprep.subr.mxu0 0.0
        %401 = vmatpush1.msra.mxu0 0.0
        %402 = vmatprep.subr.mxu0 0.0
        %403 = vmatpush1.msra.mxu0 0.0
        %404 = vmatprep.subr.mxu0 0.0
        %405 = vmatpush1.msra.mxu0 0.0
        %406 = vmatprep.subr.mxu0 0.0
        %407 = vmatpush1.msra.mxu0 0.0
        %408 = vmatprep.subr.mxu0 0.0
        %409 = vmatpush1.msra.mxu0 0.0
        %410 = vmatprep.subr.mxu0 0.0
        %411 = vmatpush1.msra.mxu0 0.0
        %412 = vmatprep.subr.mxu0 0.0
        %413 = vmatpush1.msra.mxu0 %v380
        %414 = vmatprep.subr.mxu0 0.0
        %415 = vmatpush2.msra.mxu0 0.0
        %416 = vmatprep.subr.mxu0 0.0
        %417 = vmatpush2.msra.mxu0 0.0
        %418 = vmatprep.subr.mxu0 0.0
        %419 = vmatpush2.msra.mxu0 0.0
        %420 = vmatprep.subr.mxu0 0.0
        %421 = vmatpush2.msra.mxu0 0.0
        %422 = vmatprep.subr.mxu0 0.0
        %423 = vmatpush2.msra.mxu0 0.0
        %424 = vmatprep.subr.mxu0 0.0
        %425 = vmatpush2.msra.mxu0 0.0
        %426 = vmatprep.subr.mxu0 0.0
        %427 = vmatpush2.msra.mxu0 0.0
        %428 = vmatprep.subr.mxu0 0.0
        %429 = vmatpush2.msra.mxu0 0.0
        %430 = vmatprep.subr.mxu0 0.0
        %431 = vmatpush2.msra.mxu0 0.0
        %432 = vmatprep.subr.mxu0 0.0
        %433 = vmatpush2.msra.mxu0 0.0
        %434 = vmatprep.subr.mxu0 0.0
        %435 = vmatpush2.msra.mxu0 0.0
        %436 = vmatprep.subr.mxu0 0.0
        %437 = vmatpush2.msra.mxu0 0.0
        %438 = vmatprep.subr.mxu0 0.0
        %439 = vmatpush2.msra.mxu0 0.0
        %440 = vmatprep.subr.mxu0 0.0
        %441 = vmatpush2.msra.mxu0 0.0
        %442 = vmatprep.subr.mxu0 0.0
        %443 = vmatpush2.msra.mxu0 0.0
        %444 = vmatprep.subr.mxu0 0.0
        %445 = vmatpush2.msra.mxu0 0.0
        %446 = vmatprep.mubr.f32.mxu0 0.0
        %447 = vmatmul.mubr.f32.gmra.mxu0 %v376
        %v448 = vpop.f32.mrf.mxu0
        %v449 = vadd.f32 %v373, %v448
        %v450 = vpop.f32.mrf.mxu0
        %451 = vdwg.mxu0
        %452 = vst [vmem:[%s250] sm:$0xff] %v449
        %s453 = sand.u32 %s139, 1
        %s454 = scalar_lea.sflag [#allocation4], %s453
        %s455 = sand.u32 %s139, 1
        %s456 = smul.addr %s455, 8
        %s457 = scalar_lea.vmem [#allocation5], %s456
        // Predicated region
        $region41: #{tpu_custom_call.1} parent=35 // pred_check
          %p458 = pneg %p149
        $region42: #{tpu_custom_call.1} parent=35 // pred_check_branch
          %460 = sbr.rel (%p458) target = $region44
        $region43: #{tpu_custom_call.1} parent=35 // pred_region
          %s462 = ssub.s32 128, 128
          %463 = vsyncadd %s454, %s462
          %s464 = sadd.s32 %s26, %s25
          %s465 = smul.addr %s464, 128
          %s466 = scalar_lea.hbm %s4, %s465
          %s468 = sshll.u32 %s457, 4
          %s469 = int_to_ptr.vmem [resolvable:$true] %s468
          %471 = dma.vmem_to_hbm [thread:$0]  %s469, 128, %s466, %s454
        $region44: #{tpu_custom_call.1} parent=35 // pred_fallthru
          _
      $region36: #{tpu_custom_call.1} parent=5 // pred_fallthru
        _
      %p472 = scmp.le.s32.totalorder 2, %s16
      // Predicated region
      $region45: #{tpu_custom_call.1} parent=5 // pred_check
        %p473 = pneg %p472
      $region46: #{tpu_custom_call.1} parent=5 // pred_check_branch
        %475 = sbr.rel (%p473) target = $region48
      $region47: #{tpu_custom_call.1} parent=5 // pred_region
        %s476 = ssub.s32 %s16, 2
        // Predicated region
        $region49: #{tpu_custom_call.1} parent=47 // pred_check
          %p477 = pneg %p155
        $region50: #{tpu_custom_call.1} parent=47 // pred_check_branch
          %479 = sbr.rel (%p477) target = $region52
        $region51: #{tpu_custom_call.1} parent=47 // pred_region
          %s480 = sand.u32 %s140, 1
          %s481 = scalar_lea.sflag [#allocation4], %s480
          %s482 = sand.u32 %s140, 1
          %s483 = smul.addr %s482, 8
          %s484 = scalar_lea.vmem [#allocation5], %s483
          %485 = dma.done %s481, 128
        $region52: #{tpu_custom_call.1} parent=47 // pred_fallthru
          _
      $region48: #{tpu_custom_call.1} parent=5 // pred_fallthru
        _
    $region6: #{tpu_custom_call.1} parent=1 // loop_footer
      %s20 = sadd.s32 1, %s16
    $region7: #{tpu_custom_call.1} parent=1 // loop_footer_branch
      %15 = sbr.rel target = $region3
    $region8: #{tpu_custom_call.1} parent=1 // loop_exit
      _
    %486 = vsyncpa [#allocation3], 1
    %s487 = scalar_lea.sflag [#allocation3], 1
    %488 = vsyncpa %s487, 1
    %489 = vsyncpa [#allocation4], 1
    %s490 = scalar_lea.sflag [#allocation4], 1
    %491 = vsyncpa %s490, 1

</llo_original>
